<compile_context>
chip_gen: v5e
topology: v5e:2x2
jax: 0.10.0
libtpu: 0.0.40
codegen_flags: <defaults>
</compile_context>

<pallas_src>
import functools

import jax
import jax.numpy as jnp
from jax import lax
from jax.experimental import pallas as pl
from jax.experimental.pallas import tpu as pltpu

BN_EPS = 1e-5


def _fused_kernel(x_ref, p_ref, o_ref, *, oh, ow):
    """Fused conv2d(2x2, valid) -> BatchNorm2d(train) -> conv2d(1x1).

    x_ref: (h, w)   f32 VMEM  -- input plane at its natural shape
    p_ref: (6,)     f32 SMEM  -- [w00, w01, w10, w11, scale, shift]
                                 scale = gamma * w2, shift = beta * w2 + b2
    o_ref: (oh, ow) f32 VMEM  -- output plane at its natural (valid) shape
    """
    x = x_ref[...]                                   # single full-plane load

    w00 = p_ref[0]
    w01 = p_ref[1]
    w10 = p_ref[2]
    w11 = p_ref[3]
    scale = p_ref[4]
    shift = p_ref[5]

    # --- conv1: 2x2 valid convolution from four statically shifted views ---
    x00 = x[0:oh, 0:ow]
    x01 = x[0:oh, 1:ow + 1]
    x10 = x[1:oh + 1, 0:ow]
    x11 = x[1:oh + 1, 1:ow + 1]
    acc = w00 * x00 + w01 * x01 + w10 * x10 + w11 * x11        # (oh, ow)
    # NOTE: conv1 bias is intentionally omitted: training-mode BN subtracts the
    # batch mean, which cancels any constant bias exactly (variance unchanged).

    # --- BatchNorm2d (training mode) statistics, two-pass for robustness ---
    inv_n = 1.0 / float(oh * ow)
    mean = jnp.sum(acc) * inv_n
    centered = acc - mean
    var = jnp.sum(centered * centered) * inv_n
    inv_std = lax.rsqrt(var + BN_EPS)

    # --- folded epilogue: BN affine + 1x1 conv == single scalar FMA ---
    o_ref[...] = centered * (inv_std * scale) + shift


@jax.jit
def model_forward(x_nchw, params):
    """x_nchw: (1, 1, H, W) float32. Returns (1, 1, H-1, W-1) float32."""
    n, c, h, w = x_nchw.shape
    assert n == 1 and c == 1, "module is fixed to 1 input / 1 output channel"
    assert h >= 2 and w >= 2, "conv2d(kernel=2, valid) needs h >= 2 and w >= 2"
    oh, ow = h - 1, w - 1

    x2d = x_nchw.reshape(h, w).astype(jnp.float32)

    # Fold BN affine (gamma/beta) and the 1x1 conv (w2/b2) into (scale, shift);
    # drop b1 (cancelled by the batch-mean subtraction inside the kernel).
    w1 = params["w1"].astype(jnp.float32)                       # (4,) row-major 2x2
    scale = params["gamma"][0] * params["w2"][0]
    shift = params["beta"][0] * params["w2"][0] + params["b2"][0]
    packed = jnp.concatenate([w1, jnp.stack([scale, shift])]).astype(jnp.float32)

    # Right-size the scoped-VMEM request: raise it only when a large plane
    # actually needs it (defaults are plenty for the module's 4x4 input).
    plane_bytes = h * w * 4
    vmem_need = 10 * plane_bytes + (2 << 20)      # x + shifted views + acc + out + margin
    compiler_params = None
    if vmem_need > (16 << 20):
        compiler_params = pltpu.CompilerParams(
            vmem_limit_bytes=int(min(vmem_need, 56 << 20)))
    # TODO(synk): above ~10 MiB per plane (v7x has 64 MiB VMEM) switch to a 1-D
    # grid over sublane tiles (two-pass stats via SMEM scratch, core-parallel
    # split on v7x); the single-block design targets the module's tiny input.

    kernel = functools.partial(_fused_kernel, oh=oh, ow=ow)

    out2d = pl.pallas_call(
        kernel,
        out_shape=jax.ShapeDtypeStruct((oh, ow), jnp.float32),
        in_specs=[
            pl.BlockSpec(memory_space=pltpu.MemorySpace.VMEM),   # x (full array)
            pl.BlockSpec(memory_space=pltpu.MemorySpace.SMEM),   # packed scalars
        ],
        out_specs=pl.BlockSpec(memory_space=pltpu.MemorySpace.VMEM),
        compiler_params=compiler_params,
    )(x2d, packed)

    return out2d.reshape(1, 1, oh, ow)


def init_params():
    """Deterministic parameter init mirroring the module's shapes.

    conv1.weight: (1,1,2,2), conv1.bias: (1,)
    conv2.weight: (1,1,1,1), conv2.bias: (1,)
    bn.weight (gamma): (1,), bn.bias (beta): (1,)
    """
    key = jax.random.PRNGKey(42)
    k1, k2, k3, k4 = jax.random.split(key, 4)
    w1 = jax.random.normal(k1, (1, 1, 2, 2), jnp.float32) * 0.5
    b1 = jax.random.normal(k2, (1,), jnp.float32) * 0.1
    w2 = jax.random.normal(k3, (1, 1, 1, 1), jnp.float32) * 0.5
    b2 = jax.random.normal(k4, (1,), jnp.float32) * 0.1
    gamma = jnp.ones((1,), jnp.float32)   # BatchNorm2d default affine init
    beta = jnp.zeros((1,), jnp.float32)
    return {
        "w1": w1.reshape(4),          # row-major 2x2 kernel [w00, w01, w10, w11]
        "b1": b1,                     # used by the reference path (no-op in kernel)
        "w2": w2.reshape(1),
        "b2": b2,
        "gamma": gamma,
        "beta": beta,
    }


def _reference_forward(x_nchw, params):
    """Pure-JAX reference of the ORIGINAL (unfolded) math for a sanity check."""
    x = x_nchw.reshape(x_nchw.shape[2], x_nchw.shape[3])
    w1 = params["w1"].reshape(2, 2)
    oh, ow = x.shape[0] - 1, x.shape[1] - 1
    acc = jnp.zeros((oh, ow), jnp.float32)
    for kh in range(2):
        for kw in range(2):
            acc = acc + x[kh:kh + oh, kw:kw + ow] * w1[kh, kw]
    acc = acc + params["b1"][0]
    mean = jnp.mean(acc)
    var = jnp.mean((acc - mean) ** 2)
    y = (acc - mean) / jnp.sqrt(var + BN_EPS) * params["gamma"][0] + params["beta"][0]
    out = y * params["w2"][0] + params["b2"][0]
    return out.reshape(1, 1, oh, ow)


if __name__ == "__main__":
    key = jax.random.PRNGKey(0)
    x = jax.random.normal(key, (1, 1, 4, 4), jnp.float32)   # matches torch.randn(1,1,4,4)
    params = init_params()

    out = jax.block_until_ready(model_forward(x, params))
    ref = jax.block_until_ready(_reference_forward(x, params))

    assert out.shape == (1, 1, 3, 3), out.shape
    assert jnp.allclose(out, ref, atol=1e-4, rtol=1e-4), (out, ref)

    print("KERNEL_OK")
</pallas_src>

<mosaic_0001>
module attributes {stable_mosaic.version = 11 : i64} {
  func.func @_fused_kernel(%arg0: memref<4x4xf32, #tpu.memory_space<vmem>>, %arg1: memref<6xf32, #tpu.memory_space<smem>>, %arg2: memref<3x3xf32, #tpu.memory_space<vmem>>) attributes {dimension_semantics = [], scalar_prefetch = 0 : i64, scratch_operands = 0 : i64, tpu.core_type = #tpu.core_type<tc>} {
    %c0 = arith.constant 0 : index
    %c0_0 = arith.constant 0 : index
    %0 = vector.load %arg0[%c0, %c0_0] : memref<4x4xf32, #tpu.memory_space<vmem>>, vector<4x4xf32>
    %c0_1 = arith.constant 0 : index
    %1 = memref.load %arg1[%c0_1] : memref<6xf32, #tpu.memory_space<smem>>
    %c1 = arith.constant 1 : index
    %2 = memref.load %arg1[%c1] : memref<6xf32, #tpu.memory_space<smem>>
    %c2 = arith.constant 2 : index
    %3 = memref.load %arg1[%c2] : memref<6xf32, #tpu.memory_space<smem>>
    %c3 = arith.constant 3 : index
    %4 = memref.load %arg1[%c3] : memref<6xf32, #tpu.memory_space<smem>>
    %c4 = arith.constant 4 : index
    %5 = memref.load %arg1[%c4] : memref<6xf32, #tpu.memory_space<smem>>
    %c5 = arith.constant 5 : index
    %6 = memref.load %arg1[%c5] : memref<6xf32, #tpu.memory_space<smem>>
    %7 = vector.extract_strided_slice %0 {offsets = [0, 0], sizes = [3, 3], strides = [1, 1]} : vector<4x4xf32> to vector<3x3xf32>
    %8 = vector.extract_strided_slice %0 {offsets = [0, 1], sizes = [3, 3], strides = [1, 1]} : vector<4x4xf32> to vector<3x3xf32>
    %9 = vector.extract_strided_slice %0 {offsets = [1, 0], sizes = [3, 3], strides = [1, 1]} : vector<4x4xf32> to vector<3x3xf32>
    %10 = vector.extract_strided_slice %0 {offsets = [1, 1], sizes = [3, 3], strides = [1, 1]} : vector<4x4xf32> to vector<3x3xf32>
    %11 = vector.broadcast %1 : f32 to vector<3x3xf32>
    %12 = arith.mulf %11, %7 : vector<3x3xf32>
    %13 = vector.broadcast %2 : f32 to vector<3x3xf32>
    %14 = arith.mulf %13, %8 : vector<3x3xf32>
    %15 = arith.addf %12, %14 : vector<3x3xf32>
    %16 = vector.broadcast %3 : f32 to vector<3x3xf32>
    %17 = arith.mulf %16, %9 : vector<3x3xf32>
    %18 = arith.addf %15, %17 : vector<3x3xf32>
    %19 = vector.broadcast %4 : f32 to vector<3x3xf32>
    %20 = arith.mulf %19, %10 : vector<3x3xf32>
    %21 = arith.addf %18, %20 : vector<3x3xf32>
    %22 = vector.shape_cast %21 : vector<3x3xf32> to vector<1x3x3xf32>
    %cst = arith.constant dense<0.000000e+00> : vector<1xf32>
    %23 = vector.multi_reduction <add>, %22, %cst [1, 2] : vector<1x3x3xf32> to vector<1xf32>
    %24 = vector.shape_cast %23 : vector<1xf32> to vector<1x1x1xf32>
    %25 = vector.extract %24[0, 0, 0] : f32 from vector<1x1x1xf32>
    %cst_2 = arith.constant 0.111111112 : f32
    %26 = arith.mulf %25, %cst_2 : f32
    %27 = vector.broadcast %26 : f32 to vector<3x3xf32>
    %28 = arith.subf %21, %27 : vector<3x3xf32>
    %29 = arith.mulf %28, %28 : vector<3x3xf32>
    %30 = vector.shape_cast %29 : vector<3x3xf32> to vector<1x3x3xf32>
    %cst_3 = arith.constant dense<0.000000e+00> : vector<1xf32>
    %31 = vector.multi_reduction <add>, %30, %cst_3 [1, 2] : vector<1x3x3xf32> to vector<1xf32>
    %32 = vector.shape_cast %31 : vector<1xf32> to vector<1x1x1xf32>
    %33 = vector.extract %32[0, 0, 0] : f32 from vector<1x1x1xf32>
    %cst_4 = arith.constant 0.111111112 : f32
    %34 = arith.mulf %33, %cst_4 : f32
    %cst_5 = arith.constant 9.99999974E-6 : f32
    %35 = arith.addf %34, %cst_5 : f32
    %36 = math.rsqrt %35 : f32
    %37 = arith.mulf %36, %5 : f32
    %38 = vector.broadcast %37 : f32 to vector<3x3xf32>
    %39 = arith.mulf %28, %38 : vector<3x3xf32>
    %40 = vector.broadcast %6 : f32 to vector<3x3xf32>
    %41 = arith.addf %39, %40 : vector<3x3xf32>
    %c0_6 = arith.constant 0 : index
    %c0_7 = arith.constant 0 : index
    %42 = vector.load %arg2[%c0_6, %c0_7] : memref<3x3xf32, #tpu.memory_space<vmem>>, vector<3x3xf32>
    tpu.vector_store %arg2[%c0_6, %c0_7], %41 {strides = array<i32>} : memref<3x3xf32, #tpu.memory_space<vmem>>, vector<3x3xf32>,
    return
  }
}

</mosaic_0001>

<llo_original>
// kernel: model_forward.1
$region0: #{model_forward.1}
  #allocation0 [shape = 'u32[]', space=smem, size = 0x4, offset = 0x4, fixed_abs, tag = 'smem constant byte address 0x4 - core index']
  #allocation1 [shape = 'u32[72,128]{1,0:T(1,128)}', space=vmem, size = 0x9000, scoped, tag = 'internal scratch']
  %s0 = inlined_call_operand.vmem [shape: f32[4,4], index: 0, kind: input, shape index: {}]
  %s1 = inlined_call_operand.vmem [shape: f32[6], index: 1, kind: input, shape index: {}]
  %s2 = inlined_call_operand.vmem [shape: f32[3,3], index: 2, kind: output, shape index: {}]
  %s3 = sld [smem:[#allocation0]]
  $region22: #{model_forward.1} parent=0
    _
  %s5 = ssub.s32 1, %s3
  %s6 = scalar_select 0, %s5, %s3
  $region1: #{model_forward.1} parent=0
    #allocation2 [shape = 'u8[512]{0}', space=smem, size = 0x200, scoped, tag = 'input window, operand 1, single buffered']
    #allocation3 [shape = 's32[1]{0}', space=sflag, size = 0x4, scoped, tag = 'scoped memory for model_forward.1']
    %7 = vsyncpa [#allocation3], 0
    // Predicated region
    $region2: #{model_forward.1} parent=1 // pred_check
      _
    $region3: #{model_forward.1} parent=1 // pred_check_branch
      %9 = sbr.rel (0) target = $region5
    $region4: #{model_forward.1} parent=1 // pred_region
      _
    $region5: #{model_forward.1} parent=1 // pred_fallthru
      _
    // Predicated region
    $region6: #{model_forward.1} parent=1 // pred_check
      _
    $region7: #{model_forward.1} parent=1 // pred_check_branch
      %11 = sbr.rel (0) target = $region9
    $region8: #{model_forward.1} parent=1 // pred_region
      %13 = vsyncadd [#allocation3], 0
      %s15 = sshll.u32 %s1, 4
      %s16 = int_to_ptr.vmem [resolvable:$true] %s15
      %18 = dma.vmem_to_smem %s16, 16, [#allocation2], [#allocation3]
    $region9: #{model_forward.1} parent=1 // pred_fallthru
      _
    // Predicated region
    $region10: #{model_forward.1} parent=1 // pred_check
      _
    $region11: #{model_forward.1} parent=1 // pred_check_branch
      %20 = sbr.rel (0) target = $region13
    $region12: #{model_forward.1} parent=1 // pred_region
      %22 = dma.done [#allocation3], 16
    $region13: #{model_forward.1} parent=1 // pred_fallthru
      _
    %23 = sfence
    %v24 = vld [vmem:[%s0] sm:$0xf]
    %s25 = sld [smem:[#allocation2]]
    %s26 = sld [smem:[#allocation2 + $0x1]]
    %s27 = sld [smem:[#allocation2 + $0x2]]
    %s28 = sld [smem:[#allocation2 + $0x3]]
    %s29 = sld [smem:[#allocation2 + $0x4]]
    %s30 = sld [smem:[#allocation2 + $0x5]]
    %v31 = vstv %s25
    %v32 = vmul.f32 %v31, %v24
    %v33 = vstv %s26
    %v34 = vmul.f32 %v33, %v24
    %36 = vrot.lane.b32.xlu0 %v34, 127
    %v37 = vpop.permute.xlu0 %36
    %v39 = vadd.f32 %v32, %v37
    %v40 = vstv %s27
    %v41 = vmul.f32 %v40, %v24
    %v43 = vrot.slane %v41, 1
    %v45 = vadd.f32 %v39, %v43
    %v46 = vstv %s28
    %v47 = vmul.f32 %v46, %v24
    %v49 = vrot.slane %v47, 1
    %50 = vrot.lane.b32.xlu0 %v49, 127
    %v51 = vpop.permute.xlu0 %50
    %v53 = vadd.f32 %v45, %v51
    %vm54 = vcmask 18432
    %v55 = vsel %vm54, %v53, 0.0
    %56 = vadd.xlane.f32.xlu0 %v55
    %v57 = vpop.xlane.xlu0 %56
    %v58 = vrot.slane %v57, 4
    %v59 = vadd.f32 %v57, %v58
    %v60 = vrot.slane %v59, 2
    %v61 = vadd.f32 %v59, %v60
    %v62 = vrot.slane %v61, 1
    %v63 = vadd.f32 %v61, %v62
    %s64 = vtos %v63
    %s65 = smul.f32 %s64, 0.11111111
    %v66 = vstv %s65
    %v67 = vsub.f32 %v53, %v66
    %v68 = vmul.f32 %v67, %v67
    %v69 = vsel %vm54, %v68, 0.0
    %70 = vadd.xlane.f32.xlu0 %v69
    %v71 = vpop.xlane.xlu0 %70
    %v72 = vrot.slane %v71, 4
    %v73 = vadd.f32 %v71, %v72
    %v74 = vrot.slane %v73, 2
    %v75 = vadd.f32 %v73, %v74
    %v76 = vrot.slane %v75, 1
    %v77 = vadd.f32 %v75, %v76
    %s78 = vtos %v77
    %s79 = smul.f32 %s78, 0.11111111
    %s80 = sadd.f32 %s79, 1e-05
    %v81 = vstv %s80
    %v82 = vrsqrt.pop %v81
    %v83 = vmul.f32 %v82, %v81
    %v84 = vmul.f32 %v83, %v82
    %v85 = vmul.f32 0.5, %v84
    %v86 = vsub.f32 1.5, %v85
    %v87 = vmul.f32 %v82, %v86
    %vm88 = vweird.f32 %v81
    %vm89 = vweird.f32 %v82
    %vm90 = vmor %vm88, %vm89
    %v91 = vsel %vm90, %v82, %v87
    %s92 = vtos %v91
    %s93 = smul.f32 %s92, %s29
    %v94 = vstv %s93
    %v95 = vmul.f32 %v67, %v94
    %v96 = vstv %s30
    %v97 = vadd.f32 %v95, %v96
    %98 = vst.msk [vmem:[%s2] sm:$0x7] %vm54, %v97
    // Predicated region
    $region14: #{model_forward.1} parent=1 // pred_check
      _
    $region15: #{model_forward.1} parent=1 // pred_check_branch
      %100 = sbr.rel (0) target = $region17
    $region16: #{model_forward.1} parent=1 // pred_region
      _
    $region17: #{model_forward.1} parent=1 // pred_fallthru
      _
    // Predicated region
    $region18: #{model_forward.1} parent=1 // pred_check
      _
    $region19: #{model_forward.1} parent=1 // pred_check_branch
      %102 = sbr.rel (0) target = $region21
    $region20: #{model_forward.1} parent=1 // pred_region
      _
    $region21: #{model_forward.1} parent=1 // pred_fallthru
      _
    %103 = vsyncpa [#allocation3], 1

</llo_original>
